<compile_context>
chip_gen: v5e
topology: v5e:2x2
jax: 0.10.0
libtpu: 0.0.40
codegen_flags: <defaults>
</compile_context>

<pallas_src>
import functools

import jax
import jax.numpy as jnp
from jax.experimental import pallas as pl
from jax.experimental.pallas import tpu as pltpu

NEG_SLOPE = 0.2      # LeakyReLU negative slope (module default)
NEG_INF = -1e30      # mask value for non-edges


# --------------------------------------------------------------------------
# Stage 1: linear projection + per-head attention logits (all on the MXU)
# --------------------------------------------------------------------------
def proj_kernel(x_ref, w_ref, a_ref, feat_ref, el_ref, er_ref, *, num_heads):
    # x_ref:   (T, Din)       bf16 node-feature tile (cast hoisted to wrapper)
    # w_ref:   (Din, H*Dout)  bf16 fc weight, grid-resident
    # a_ref:   (H*Dout, 2H)   bf16 packed [attn_l | attn_r] block-diagonals, resident
    # feat_ref:(T, H*Dout)    bf16 projected features
    # el_ref:  (H, T)         f32 per-src logits (head-major for stage 2)
    # er_ref:  (T, H)         f32 per-dst logits
    feat = jnp.dot(x_ref[...], w_ref[...], preferred_element_type=jnp.float32)
    feat_bf = feat.astype(jnp.bfloat16)
    logits = jnp.dot(feat_bf, a_ref[...], preferred_element_type=jnp.float32)  # (T, 2H)
    el_ref[...] = jnp.transpose(logits[:, :num_heads])        # (H, T), tiny XLU op
    er_ref[...] = logits[:, num_heads:]
    feat_ref[...] = feat_bf


# --------------------------------------------------------------------------
# Stage 2: edge softmax + attention-weighted aggregation, tiled over dst rows
# --------------------------------------------------------------------------
def att_kernel(feat_ref, el_ref, er_ref, adj_ref, out_ref, *att_refs,
               num_heads, out_feats, exp_bf16):
    # feat_ref: (N, H*Dout) bf16, resident across the grid
    # el_ref:   (H, N)      f32, resident (head-major -> lane-dense row reads)
    # er_ref:   (T, H)      f32, dst tile
    # adj_ref:  (T, N)      int8 adjacency tile, adj[dst, src] in {0,1}
    # out_ref:  (T, H*Dout) f32 aggregated features (single lane-dense store)
    # att_refs: optionally ((H, T, N) bf16 attention weights,)
    att_ref = att_refs[0] if att_refs else None
    adj_f = adj_ref[...].astype(jnp.float32)   # int8 HBM stream, f32 compare
    mask = adj_f > 0.0                          # hoisted out of the head loop
    er_tile = er_ref[...]                       # (T, H)
    rst_parts = []
    for h in range(num_heads):                  # static, unrolled
        el_row = el_ref[pl.ds(h, 1), :]         # (1, N) src logits
        er_col = er_tile[:, h:h + 1]            # (T, 1) dst logits
        e = er_col + el_row                     # (T, N)  e[dst, src]
        e = jnp.maximum(e, NEG_SLOPE * e)       # LeakyReLU (single max + mul)
        e = jnp.where(mask, e, jnp.float32(NEG_INF))
        e_max = jnp.max(e, axis=1, keepdims=True)
        x = e - e_max
        if exp_bf16:                            # bf16 EUP on v6e/v7x
            p = jnp.exp(x.astype(jnp.bfloat16)).astype(jnp.float32)
        else:                                   # v5e: no bf16 EUP
            p = jnp.exp(x)                      # masked entries underflow to 0
        denom = jnp.sum(p, axis=1, keepdims=True)           # >= 1 (edge @ max)
        alpha = p * pl.reciprocal(denom, approx=True)       # EUP divide
        if att_ref is not None:
            att_ref[h, :, :] = alpha.astype(att_ref.dtype)
        feat_h = feat_ref[:, pl.ds(h * out_feats, out_feats)]   # (N, Dout) bf16
        rst_parts.append(jnp.dot(alpha.astype(jnp.bfloat16), feat_h,
                                 preferred_element_type=jnp.float32))
    # one lane-dense (T, H*Dout) store instead of H narrow stores
    out_ref[...] = jnp.concatenate(rst_parts, axis=1).astype(out_ref.dtype)


# --------------------------------------------------------------------------
# Wrapper helpers
# --------------------------------------------------------------------------
def _round_up(x, m):
    return (x + m - 1) // m * m


def _vmem_cap_bytes():
    try:
        return int(pltpu.get_tpu_info().vmem_capacity_bytes)
    except Exception:
        return 64 << 20          # conservative default (safe on every gen)


def _default_exp_bf16():
    try:
        kind = jax.devices()[0].device_kind.lower()
    except Exception:
        return False
    return ("v6" in kind) or ("v7" in kind)


def _pick_tile(n_pad, max_tile):
    for t in (512, 256, 128):
        if t <= max_tile and n_pad % t == 0:
            return t
    return 128


def _vmem_limit(per_step_bytes, resident_bytes, cap):
    # 2x per-step blocks (double buffered) + 1x residents + headroom,
    # clamped to ~85% of physical VMEM (leaves compiler scratch headroom).
    est = 2 * per_step_bytes + resident_bytes + (8 << 20)
    return int(min(max(est, 16 << 20), int(cap * 0.85)))


def _pack_attn(attn_l, attn_r, num_heads, out_feats):
    # (H, Dout) -> block-diagonal (H*Dout, H); concat l|r -> (H*Dout, 2H)
    eye = jnp.eye(num_heads, dtype=jnp.float32)

    def block_diag(a):
        return (a[:, :, None] * eye[:, None, :]).reshape(
            num_heads * out_feats, num_heads)

    return jnp.concatenate([block_diag(attn_l), block_diag(attn_r)], axis=1)


# --------------------------------------------------------------------------
# Wrapper
# --------------------------------------------------------------------------
def gat_forward(feat, adj, w, attn_l, attn_r, *, num_heads, out_feats,
                return_attention=True, exp_bf16=None):
    """Pallas GATConv forward.

    Returns:
      rst: (N, H, Dout) float32
      att: (H, N_dst, N_src) bfloat16 edge-softmax weights when
           return_attention=True, else None (fast path: skips the O(H*N^2)
           HBM write entirely).
    """
    n, din = feat.shape
    hd = num_heads * out_feats
    if exp_bf16 is None:
        exp_bf16 = _default_exp_bf16()

    cap = _vmem_cap_bytes()
    max_tile = 256 if cap >= (96 << 20) else 128   # bigger dst tiles on v5e/v6e
    n_pad = _round_up(max(n, 128), 128)
    tile = _pick_tile(n_pad, max_tile)
    pad = n_pad - n

    # Operand quantization / packing hoisted out of the kernels.
    x_b = jnp.pad(feat, ((0, pad), (0, 0))).astype(jnp.bfloat16)
    w_b = w.astype(jnp.bfloat16)
    a_pack = _pack_attn(attn_l, attn_r, num_heads, out_feats).astype(jnp.bfloat16)
    adj_i8 = (jnp.pad(adj, ((0, pad), (0, pad))) > 0).astype(jnp.int8)

    # ---- stage 1: projection + logits -------------------------------------
    per_step1 = (tile * din * 2 + tile * hd * 2
                 + num_heads * tile * 4 + tile * num_heads * 4)
    resident1 = din * hd * 2 + hd * (2 * num_heads) * 2
    feat_p, el_hm, er = pl.pallas_call(
        functools.partial(proj_kernel, num_heads=num_heads),
        grid=(n_pad // tile,),
        in_specs=[
            pl.BlockSpec((tile, din), lambda i: (i, 0)),
            pl.BlockSpec((din, hd), lambda i: (0, 0)),             # resident
            pl.BlockSpec((hd, 2 * num_heads), lambda i: (0, 0)),   # resident
        ],
        out_specs=(
            pl.BlockSpec((tile, hd), lambda i: (i, 0)),
            pl.BlockSpec((num_heads, tile), lambda i: (0, i)),     # head-major el
            pl.BlockSpec((tile, num_heads), lambda i: (i, 0)),
        ),
        out_shape=(
            jax.ShapeDtypeStruct((n_pad, hd), jnp.bfloat16),
            jax.ShapeDtypeStruct((num_heads, n_pad), jnp.float32),
            jax.ShapeDtypeStruct((n_pad, num_heads), jnp.float32),
        ),
        compiler_params=pltpu.CompilerParams(
            dimension_semantics=("parallel",),
            vmem_limit_bytes=_vmem_limit(per_step1, resident1, cap)),
    )(x_b, w_b, a_pack)

    # ---- stage 2: softmax + aggregation, tiled over destination nodes -----
    per_step2 = tile * num_heads * 4 + tile * n_pad * 1 + tile * hd * 4
    if return_attention:
        per_step2 += num_heads * tile * n_pad * 2
    resident2 = n_pad * hd * 2 + num_heads * n_pad * 4

    out_specs = [pl.BlockSpec((tile, hd), lambda i: (i, 0))]
    out_shape = [jax.ShapeDtypeStruct((n_pad, hd), jnp.float32)]
    if return_attention:
        out_specs.append(
            pl.BlockSpec((num_heads, tile, n_pad), lambda i: (0, i, 0)))
        out_shape.append(
            jax.ShapeDtypeStruct((num_heads, n_pad, n_pad), jnp.bfloat16))

    kernel = functools.partial(att_kernel, num_heads=num_heads,
                               out_feats=out_feats, exp_bf16=exp_bf16)
    results = pl.pallas_call(
        kernel,
        grid=(n_pad // tile,),
        in_specs=[
            pl.BlockSpec((n_pad, hd), lambda i: (0, 0)),            # feat resident
            pl.BlockSpec((num_heads, n_pad), lambda i: (0, 0)),     # el resident
            pl.BlockSpec((tile, num_heads), lambda i: (i, 0)),      # er dst tile
            pl.BlockSpec((tile, n_pad), lambda i: (i, 0)),          # adj dst tile (int8)
        ],
        out_specs=tuple(out_specs),
        out_shape=tuple(out_shape),
        compiler_params=pltpu.CompilerParams(
            dimension_semantics=("parallel",),
            vmem_limit_bytes=_vmem_limit(per_step2, resident2, cap)),
    )(feat_p, el_hm, er, adj_i8)

    rst = results[0][:n].reshape(n, num_heads, out_feats)
    att = results[1][:, :n, :n] if return_attention else None
    return rst, att


# --------------------------------------------------------------------------
# Reference + param init + demo
# --------------------------------------------------------------------------
def gat_reference(feat, adj, w, attn_l, attn_r, num_heads, out_feats,
                  exp_bf16=False):
    """Pure-JAX reference with the same bf16 operand quantization policy."""
    bf = lambda t: t.astype(jnp.bfloat16).astype(jnp.float32)
    n = feat.shape[0]
    proj = jnp.dot(bf(feat), bf(w))                          # (N, H*Dout)
    f = bf(proj).reshape(n, num_heads, out_feats)
    el = jnp.sum(f * bf(attn_l)[None], axis=-1)              # (N, H) per src
    er = jnp.sum(f * bf(attn_r)[None], axis=-1)              # (N, H) per dst
    e = el[None, :, :] + er[:, None, :]                      # (dst, src, H)
    e = jnp.maximum(e, NEG_SLOPE * e)
    e = jnp.where(adj[:, :, None] > 0, e, NEG_INF)
    x = e - jnp.max(e, axis=1, keepdims=True)
    p = jnp.exp(bf(x)) if exp_bf16 else jnp.exp(x)
    alpha = p / jnp.sum(p, axis=1, keepdims=True)
    rst = jnp.einsum('dsh,shf->dhf', alpha, f)
    return rst, alpha


def make_params(key, in_feats, out_feats, num_heads):
    """Deterministic xavier_normal_-style init (gain = sqrt(2), as in reset_parameters)."""
    kw, kl, kr = jax.random.split(key, 3)
    gain = jnp.sqrt(2.0)
    # fc.weight is (H*Dout, Din) in torch; we store its transpose (Din, H*Dout).
    fan_in, fan_out = in_feats, num_heads * out_feats
    std_w = gain * jnp.sqrt(2.0 / (fan_in + fan_out))
    w = std_w * jax.random.normal(kw, (in_feats, num_heads * out_feats), jnp.float32)
    # attn tensors are (1, H, Dout) in torch; torch xavier on 3D: fan_in=H*Dout, fan_out=Dout.
    std_a = gain * jnp.sqrt(2.0 / (num_heads * out_feats + out_feats))
    attn_l = std_a * jax.random.normal(kl, (num_heads, out_feats), jnp.float32)
    attn_r = std_a * jax.random.normal(kr, (num_heads, out_feats), jnp.float32)
    return w, attn_l, attn_r


if __name__ == "__main__":
    N = 320        # not a multiple of 256 -> exercises padding + multi-step grid
    IN_FEATS = 32
    OUT_FEATS = 16
    NUM_HEADS = 4

    key = jax.random.PRNGKey(0)
    k_feat, k_adj, k_param = jax.random.split(key, 3)

    feat = jax.random.normal(k_feat, (N, IN_FEATS), jnp.float32)
    # Random directed graph + self-loops so every node has >=1 incoming edge.
    adj = jax.random.bernoulli(k_adj, p=0.3, shape=(N, N)).astype(jnp.float32)
    adj = jnp.maximum(adj, jnp.eye(N, dtype=jnp.float32))   # adj[dst, src]

    w, attn_l, attn_r = make_params(k_param, IN_FEATS, OUT_FEATS, NUM_HEADS)
    exp_bf16 = _default_exp_bf16()

    # fast path: no dense attention materialization (stage 2 compute-bound)
    rst_fast, att_none = gat_forward(feat, adj, w, attn_l, attn_r,
                                     num_heads=NUM_HEADS, out_feats=OUT_FEATS,
                                     return_attention=False, exp_bf16=exp_bf16)
    # full path: also materializes the (H, N, N) edge-softmax weights
    rst, att = gat_forward(feat, adj, w, attn_l, attn_r,
                           num_heads=NUM_HEADS, out_feats=OUT_FEATS,
                           return_attention=True, exp_bf16=exp_bf16)
    jax.block_until_ready((rst_fast, rst, att))

    assert att_none is None
    assert rst_fast.shape == (N, NUM_HEADS, OUT_FEATS)
    assert rst.shape == (N, NUM_HEADS, OUT_FEATS)
    assert att.shape == (NUM_HEADS, N, N) and att.dtype == jnp.bfloat16
    assert bool(jnp.all(jnp.isfinite(rst)))
    assert bool(jnp.max(jnp.abs(rst_fast - rst)) < 1e-5)

    att_f32 = att.astype(jnp.float32)
    # attention over incoming edges of each dst sums to 1 (bf16 storage)
    row_sums = jnp.sum(att_f32, axis=2)                      # (H, N_dst)
    assert bool(jnp.all(jnp.abs(row_sums - 1.0) < 2e-2))
    # attention mass only on edges
    assert bool(jnp.all(jnp.where(adj[None] > 0, 0.0, att_f32) < 1e-6))

    # compare against pure-JAX reference (same quantization policy)
    rst_ref, alpha_ref = gat_reference(feat, adj, w, attn_l, attn_r,
                                       NUM_HEADS, OUT_FEATS, exp_bf16=exp_bf16)
    att_dsh = jnp.transpose(att_f32, (1, 2, 0))              # (dst, src, H)
    assert bool(jnp.max(jnp.abs(att_dsh - alpha_ref)) < 2.5e-2)
    assert bool(jnp.max(jnp.abs(rst - rst_ref)) < 6e-2)

    print("KERNEL_OK")
</pallas_src>

<mosaic_0001>
module attributes {stable_mosaic.version = 11 : i64} {
  func.func @proj_kernel(%arg0: i32, %arg1: memref<128x32xbf16, #tpu.memory_space<vmem>>, %arg2: memref<32x64xbf16, #tpu.memory_space<vmem>>, %arg3: memref<64x8xbf16, #tpu.memory_space<vmem>>, %arg4: memref<128x64xbf16, #tpu.memory_space<vmem>>, %arg5: memref<4x128xf32, #tpu.memory_space<vmem>>, %arg6: memref<128x4xf32, #tpu.memory_space<vmem>>) attributes {dimension_semantics = [#tpu.dimension_semantics<parallel>], iteration_bounds = array<i64: 3>, scalar_prefetch = 0 : i64, scratch_operands = 0 : i64, tpu.core_type = #tpu.core_type<tc>, window_params = [{transform_indices = @transform_0, window_bounds = array<i64: 128, 32>}, {pipeline_mode = #tpu.pipeline_mode<synchronous>, transform_indices = @transform_1, window_bounds = array<i64: 32, 64>}, {pipeline_mode = #tpu.pipeline_mode<synchronous>, transform_indices = @transform_2, window_bounds = array<i64: 64, 8>}, {transform_indices = @transform_3, window_bounds = array<i64: 128, 64>}, {transform_indices = @transform_4, window_bounds = array<i64: 4, 128>}, {transform_indices = @transform_5, window_bounds = array<i64: 128, 4>}]} {
    %c0 = arith.constant 0 : index
    %c0_0 = arith.constant 0 : index
    %0 = vector.load %arg1[%c0, %c0_0] : memref<128x32xbf16, #tpu.memory_space<vmem>>, vector<128x32xbf16>
    %c0_1 = arith.constant 0 : index
    %c0_2 = arith.constant 0 : index
    %1 = vector.load %arg2[%c0_1, %c0_2] : memref<32x64xbf16, #tpu.memory_space<vmem>>, vector<32x64xbf16>
    %cst = arith.constant dense<0.000000e+00> : vector<128x64xf32>
    %2 = tpu.matmul %0, %1, %cst {dimension_numbers = #tpu.dot_dimension_numbers<[1], [0], [0], [1], [0, 0, 1, 1], [], []>} : vector<128x32xbf16>, vector<32x64xbf16>, vector<128x64xf32> -> vector<128x64xf32>
    %3 = arith.truncf %2 : vector<128x64xf32> to vector<128x64xbf16>
    %c0_3 = arith.constant 0 : index
    %c0_4 = arith.constant 0 : index
    %4 = vector.load %arg3[%c0_3, %c0_4] : memref<64x8xbf16, #tpu.memory_space<vmem>>, vector<64x8xbf16>
    %cst_5 = arith.constant dense<0.000000e+00> : vector<128x8xf32>
    %5 = tpu.matmul %3, %4, %cst_5 {dimension_numbers = #tpu.dot_dimension_numbers<[1], [0], [0], [1], [0, 0, 1, 1], [], []>} : vector<128x64xbf16>, vector<64x8xbf16>, vector<128x8xf32> -> vector<128x8xf32>
    %6 = vector.extract_strided_slice %5 {offsets = [0, 0], sizes = [128, 4], strides = [1, 1]} : vector<128x8xf32> to vector<128x4xf32>
    %7 = tpu.transpose %6, [1, 0] : vector<128x4xf32> -> vector<4x128xf32>
    %c0_6 = arith.constant 0 : index
    %c0_7 = arith.constant 0 : index
    %8 = vector.load %arg5[%c0_6, %c0_7] : memref<4x128xf32, #tpu.memory_space<vmem>>, vector<4x128xf32>
    tpu.vector_store %arg5[%c0_6, %c0_7], %7 {strides = array<i32>} : memref<4x128xf32, #tpu.memory_space<vmem>>, vector<4x128xf32>,
    %9 = vector.extract_strided_slice %5 {offsets = [0, 4], sizes = [128, 4], strides = [1, 1]} : vector<128x8xf32> to vector<128x4xf32>
    %c0_8 = arith.constant 0 : index
    %c0_9 = arith.constant 0 : index
    %10 = vector.load %arg6[%c0_8, %c0_9] : memref<128x4xf32, #tpu.memory_space<vmem>>, vector<128x4xf32>
    tpu.vector_store %arg6[%c0_8, %c0_9], %9 {strides = array<i32>} : memref<128x4xf32, #tpu.memory_space<vmem>>, vector<128x4xf32>,
    %c0_10 = arith.constant 0 : index
    %c0_11 = arith.constant 0 : index
    %11 = vector.load %arg4[%c0_10, %c0_11] : memref<128x64xbf16, #tpu.memory_space<vmem>>, vector<128x64xbf16>
    tpu.vector_store %arg4[%c0_10, %c0_11], %3 {strides = array<i32>} : memref<128x64xbf16, #tpu.memory_space<vmem>>, vector<128x64xbf16>,
    return
  }
  func.func @transform_0(%arg0: i32) -> (i32, i32) {
    %c0_i32 = arith.constant 0 : i32
    %c0_i32_0 = arith.constant 0 : i32
    return %arg0, %c0_i32 : i32, i32
  }
  func.func @transform_1(%arg0: i32) -> (i32, i32) {
    %c0_i32 = arith.constant 0 : i32
    %c0_i32_0 = arith.constant 0 : i32
    %c0_i32_1 = arith.constant 0 : i32
    return %c0_i32, %c0_i32_0 : i32, i32
  }
  func.func @transform_2(%arg0: i32) -> (i32, i32) {
    %c0_i32 = arith.constant 0 : i32
    %c0_i32_0 = arith.constant 0 : i32
    %c0_i32_1 = arith.constant 0 : i32
    return %c0_i32, %c0_i32_0 : i32, i32
  }
  func.func @transform_3(%arg0: i32) -> (i32, i32) {
    %c0_i32 = arith.constant 0 : i32
    %c0_i32_0 = arith.constant 0 : i32
    return %arg0, %c0_i32 : i32, i32
  }
  func.func @transform_4(%arg0: i32) -> (i32, i32) {
    %c0_i32 = arith.constant 0 : i32
    %c0_i32_0 = arith.constant 0 : i32
    return %c0_i32, %arg0 : i32, i32
  }
  func.func @transform_5(%arg0: i32) -> (i32, i32) {
    %c0_i32 = arith.constant 0 : i32
    %c0_i32_0 = arith.constant 0 : i32
    return %arg0, %c0_i32 : i32, i32
  }
}

</mosaic_0001>

<llo_original>
// kernel: tpu_custom_call.1
$region0: #{tpu_custom_call.1}
  #allocation0 [shape = 'u32[]', space=smem, size = 0x4, offset = 0x4, fixed_abs, tag = 'smem constant byte address 0x4 - core index']
  #allocation1 [shape = 'u32[72,128]{1,0:T(1,128)}', space=vmem, size = 0x9000, scoped, tag = 'internal scratch']
  %s0 = inlined_call_operand.vmem [shape: bf16[384,32], index: 0, kind: input, shape index: {}]
  %s1 = inlined_call_operand.vmem [shape: bf16[32,64], index: 1, kind: input, shape index: {}]
  %s2 = inlined_call_operand.vmem [shape: bf16[64,8], index: 2, kind: input, shape index: {}]
  %s3 = inlined_call_operand.vmem [shape: bf16[384,64], index: 3, kind: output, shape index: {0}]
  %s4 = inlined_call_operand.hbm [shape: f32[4,384], index: 4, kind: output, shape index: {1}]
  %s5 = inlined_call_operand.vmem [shape: f32[384,4], index: 5, kind: output, shape index: {2}]
  %6 = xla_tuple %s3, %s4, %s5
  %s7 = sld [smem:[#allocation0]]
  $region61: #{tpu_custom_call.1} parent=0
    _
  %s9 = ssub.s32 1, %s7
  %s10 = scalar_select 0, %s9, %s7
  $region1: #{tpu_custom_call.1} parent=0
    #allocation2 [shape = 'u8[4096]{0}', space=vmem, size = 0x1000, scoped, tag = 'output window, operand 1']
    #allocation3 [shape = 's32[2]{0}', space=sflag, size = 0x8, scoped, tag = 'scoped memory for tpu_custom_call.1']
    %11 = vsyncpa [#allocation3], 0
    %s12 = scalar_lea.sflag [#allocation3], 1
    %13 = vsyncpa %s12, 0
    loop: start=0, step=1, limit=5
    $region2: #{tpu_custom_call.1} parent=1 // loop_pre_header
      _
    $region3: #{tpu_custom_call.1} parent=1 // loop_header
      %s15 = sphi 0, %s19
      %p16 = scmp.ge.s32.totalorder %s15, 5
      %s25 = sphi 0, %s27
      %s28 = sphi 0, %s25
      %s29 = sphi 0, %s28
      %s45 = sphi 0, %s29
      %s49 = sphi 0, %s49
      %s51 = sphi 0, %s49
      %s52 = sphi 0, %s51
      %s66 = sphi 0, %s52
      %s70 = sphi 0, %s70
      %s72 = sphi 0, %s70
      %s73 = sphi 0, %s72
      %s87 = sphi 0, %s73
      %s93 = sphi 0, %s95
      %s96 = sphi 0, %s93
      %s97 = sphi 0, %s96
      %s113 = sphi 0, %s97
      %s119 = sphi 0, %s121
      %s122 = sphi 0, %s119
      %s123 = sphi 0, %s122
      %s139 = sphi 0, %s123
      %s145 = sphi 0, %s147
      %s148 = sphi 0, %s145
      %s149 = sphi 0, %s148
      %s165 = sphi 0, %s149
    $region4: #{tpu_custom_call.1} parent=1 // loop_header_branch
      %18 = sbr.rel (%p16) target = $region8
    $region5: #{tpu_custom_call.1} parent=1 // loop_body
      %s20 = ssub.s32 %s15, 1
      %s21 = ssub.s32 %s15, 2
      %s22 = sadd.s32 %s15, 1
      %s23 = ssub.s32 %s15, %s22
      %p24 = scmp.eq.s32.totalorder %s23, 0
      %s26 = sadd.s32 %s25, 1
      %s27 = scalar_select %p24, %s25, %s26
      %p30 = pneg %p24
      %p31 = scmp.eq.s32.totalorder %s15, 2
      %p32 = por %p30, %p31
      %p33 = scmp.ne.s32.totalorder %s25, %s28
      %p34 = scmp.eq.s32.totalorder %s15, 0
      %p35 = por %p33, %p34
      %p36 = scmp.ne.s32.totalorder %s25, %s28
      %p37 = scmp.eq.s32.totalorder %s20, 2
      %p38 = por %p36, %p37
      %p39 = scmp.ne.s32.totalorder %s28, %s29
      %p40 = scmp.eq.s32.totalorder %s20, 0
      %p41 = por %p39, %p40
      %p42 = scmp.ne.s32.totalorder %s28, %s29
      %p43 = scmp.eq.s32.totalorder %s21, 2
      %p44 = por %p42, %p43
      %p46 = scmp.ne.s32.totalorder %s29, %s45
      %p47 = scmp.eq.s32.totalorder %s21, 0
      %p48 = por %p46, %p47
      %s50 = sadd.s32 %s49, 1
      %p53 = scmp.eq.s32.totalorder %s15, 2
      %p54 = scmp.ne.s32.totalorder %s49, %s51
      %p55 = scmp.eq.s32.totalorder %s15, 0
      %p56 = por %p54, %p55
      %p57 = scmp.ne.s32.totalorder %s49, %s51
      %p58 = scmp.eq.s32.totalorder %s20, 2
      %p59 = por %p57, %p58
      %p60 = scmp.ne.s32.totalorder %s51, %s52
      %p61 = scmp.eq.s32.totalorder %s20, 0
      %p62 = por %p60, %p61
      %p63 = scmp.ne.s32.totalorder %s51, %s52
      %p64 = scmp.eq.s32.totalorder %s21, 2
      %p65 = por %p63, %p64
      %p67 = scmp.ne.s32.totalorder %s52, %s66
      %p68 = scmp.eq.s32.totalorder %s21, 0
      %p69 = por %p67, %p68
      %s71 = sadd.s32 %s70, 1
      %p74 = scmp.eq.s32.totalorder %s15, 2
      %p75 = scmp.ne.s32.totalorder %s70, %s72
      %p76 = scmp.eq.s32.totalorder %s15, 0
      %p77 = por %p75, %p76
      %p78 = scmp.ne.s32.totalorder %s70, %s72
      %p79 = scmp.eq.s32.totalorder %s20, 2
      %p80 = por %p78, %p79
      %p81 = scmp.ne.s32.totalorder %s72, %s73
      %p82 = scmp.eq.s32.totalorder %s20, 0
      %p83 = por %p81, %p82
      %p84 = scmp.ne.s32.totalorder %s72, %s73
      %p85 = scmp.eq.s32.totalorder %s21, 2
      %p86 = por %p84, %p85
      %p88 = scmp.ne.s32.totalorder %s73, %s87
      %p89 = scmp.eq.s32.totalorder %s21, 0
      %p90 = por %p88, %p89
      %s91 = ssub.s32 %s15, %s22
      %p92 = scmp.eq.s32.totalorder %s91, 0
      %s94 = sadd.s32 %s93, 1
      %s95 = scalar_select %p92, %s93, %s94
      %p98 = pneg %p92
      %p99 = scmp.eq.s32.totalorder %s15, 2
      %p100 = por %p98, %p99
      %p101 = scmp.ne.s32.totalorder %s93, %s96
      %p102 = scmp.eq.s32.totalorder %s15, 0
      %p103 = por %p101, %p102
      %p104 = scmp.ne.s32.totalorder %s93, %s96
      %p105 = scmp.eq.s32.totalorder %s20, 2
      %p106 = por %p104, %p105
      %p107 = scmp.ne.s32.totalorder %s96, %s97
      %p108 = scmp.eq.s32.totalorder %s20, 0
      %p109 = por %p107, %p108
      %p110 = scmp.ne.s32.totalorder %s96, %s97
      %p111 = scmp.eq.s32.totalorder %s21, 2
      %p112 = por %p110, %p111
      %p114 = scmp.ne.s32.totalorder %s97, %s113
      %p115 = scmp.eq.s32.totalorder %s21, 0
      %p116 = por %p114, %p115
      %s117 = ssub.s32 %s15, %s22
      %p118 = scmp.eq.s32.totalorder %s117, 0
      %s120 = sadd.s32 %s119, 1
      %s121 = scalar_select %p118, %s119, %s120
      %p124 = pneg %p118
      %p125 = scmp.eq.s32.totalorder %s15, 2
      %p126 = por %p124, %p125
      %p127 = scmp.ne.s32.totalorder %s119, %s122
      %p128 = scmp.eq.s32.totalorder %s15, 0
      %p129 = por %p127, %p128
      %p130 = scmp.ne.s32.totalorder %s119, %s122
      %p131 = scmp.eq.s32.totalorder %s20, 2
      %p132 = por %p130, %p131
      %p133 = scmp.ne.s32.totalorder %s122, %s123
      %p134 = scmp.eq.s32.totalorder %s20, 0
      %p135 = por %p133, %p134
      %p136 = scmp.ne.s32.totalorder %s122, %s123
      %p137 = scmp.eq.s32.totalorder %s21, 2
      %p138 = por %p136, %p137
      %p140 = scmp.ne.s32.totalorder %s123, %s139
      %p141 = scmp.eq.s32.totalorder %s21, 0
      %p142 = por %p140, %p141
      %s143 = ssub.s32 %s15, %s22
      %p144 = scmp.eq.s32.totalorder %s143, 0
      %s146 = sadd.s32 %s145, 1
      %s147 = scalar_select %p144, %s145, %s146
      %p150 = pneg %p144
      %p151 = scmp.eq.s32.totalorder %s15, 2
      %p152 = por %p150, %p151
      %p153 = scmp.ne.s32.totalorder %s145, %s148
      %p154 = scmp.eq.s32.totalorder %s15, 0
      %p155 = por %p153, %p154
      %p156 = scmp.ne.s32.totalorder %s145, %s148
      %p157 = scmp.eq.s32.totalorder %s20, 2
      %p158 = por %p156, %p157
      %p159 = scmp.ne.s32.totalorder %s148, %s149
      %p160 = scmp.eq.s32.totalorder %s20, 0
      %p161 = por %p159, %p160
      %p162 = scmp.ne.s32.totalorder %s148, %s149
      %p163 = scmp.eq.s32.totalorder %s21, 2
      %p164 = por %p162, %p163
      %p166 = scmp.ne.s32.totalorder %s149, %s165
      %p167 = scmp.eq.s32.totalorder %s21, 0
      %p168 = por %p166, %p167
      %p169 = scmp.le.s32.totalorder 1, %s15
      %p170 = scmp.lt.s32.totalorder %s15, 4
      %p171 = pnand %p169, %p170
      %p172 = pneg %p171
      // Predicated region
      $region9: #{tpu_custom_call.1} parent=5 // pred_check
        _
      $region10: #{tpu_custom_call.1} parent=5 // pred_check_branch
        %174 = sbr.rel (%p171) target = $region12
      $region11: #{tpu_custom_call.1} parent=5 // pred_region
        %s175 = ssub.s32 %s15, 1
        // Predicated region
        $region13: #{tpu_custom_call.1} parent=11 // pred_check
          %p176 = pneg %p62
        $region14: #{tpu_custom_call.1} parent=11 // pred_check_branch
          %178 = sbr.rel (%p176) target = $region16
        $region15: #{tpu_custom_call.1} parent=11 // pred_region
          _
        $region16: #{tpu_custom_call.1} parent=11 // pred_fallthru
          _
        // Predicated region
        $region17: #{tpu_custom_call.1} parent=11 // pred_check
          %p179 = pneg %p83
        $region18: #{tpu_custom_call.1} parent=11 // pred_check_branch
          %181 = sbr.rel (%p179) target = $region20
        $region19: #{tpu_custom_call.1} parent=11 // pred_region
          _
        $region20: #{tpu_custom_call.1} parent=11 // pred_fallthru
          _
      $region12: #{tpu_custom_call.1} parent=5 // pred_fallthru
        _
      %p182 = scmp.lt.s32.totalorder %s15, 3
      // Predicated region
      $region21: #{tpu_custom_call.1} parent=5 // pred_check
        %p183 = pneg %p182
      $region22: #{tpu_custom_call.1} parent=5 // pred_check_branch
        %185 = sbr.rel (%p183) target = $region24
      $region23: #{tpu_custom_call.1} parent=5 // pred_region
        // Predicated region
        $region25: #{tpu_custom_call.1} parent=23 // pred_check
          %p186 = pneg %p35
        $region26: #{tpu_custom_call.1} parent=23 // pred_check_branch
          %188 = sbr.rel (%p186) target = $region28
        $region27: #{tpu_custom_call.1} parent=23 // pred_region
          %s189 = smul.u32 16, %s15
          %p190 = scmp.lt.s32.totalorder %s189, 47
          %s191 = scalar_select %p190, %s189, 47
          %s192 = smul.addr %s191, 4
          %s193 = scalar_lea.vmem %s0, %s192
          %s194 = smul.u32 16, %s15
        $region28: #{tpu_custom_call.1} parent=23 // pred_fallthru
          _
      $region24: #{tpu_custom_call.1} parent=5 // pred_fallthru
        _
      %p195 = scmp.le.s32.totalorder 1, %s15
      %p196 = scmp.lt.s32.totalorder %s15, 4
      %p197 = pnand %p195, %p196
      %p198 = pneg %p197
      // Predicated region
      $region29: #{tpu_custom_call.1} parent=5 // pred_check
        _
      $region30: #{tpu_custom_call.1} parent=5 // pred_check_branch
        %200 = sbr.rel (%p197) target = $region32
      $region31: #{tpu_custom_call.1} parent=5 // pred_region
        %s201 = ssub.s32 %s15, 1
        %s202 = smul.u32 16, %s20
        %p203 = scmp.lt.s32.totalorder %s202, 47
        %s204 = scalar_select %p203, %s202, 47
        %s205 = smul.addr %s204, 4
        %s206 = scalar_lea.vmem %s0, %s205
        %p207 = pneg %p41
        %p208 = pneg %p38
        %p209 = pneg %p62
        %p210 = pneg %p59
        %p211 = pneg %p83
        %p212 = pneg %p80
        %p213 = pneg %p109
        %p214 = pneg %p106
        %s215 = smul.u32 16, %s20
        %p216 = scmp.lt.s32.totalorder %s215, 47
        %s217 = scalar_select %p216, %s215, 47
        %s218 = smul.addr %s217, 4
        %s219 = scalar_lea.vmem %s3, %s218
        %p220 = pneg %p135
        %p221 = pneg %p132
        %s222 = sand.u32 %s122, 1
        %s223 = scalar_lea.sflag [#allocation3], %s222
        %s224 = sand.u32 %s122, 1
        %s225 = smul.addr %s224, 4
        %s226 = scalar_lea.vmem [#allocation2], %s225
        %p227 = pneg %p161
        %p228 = pneg %p158
        %s229 = smul.u32 16, %s20
        %p230 = scmp.lt.s32.totalorder %s229, 47
        %s231 = scalar_select %p230, %s229, 47
        %s232 = smul.addr %s231, 8
        %s233 = scalar_lea.vmem %s5, %s232
        %s234 = smul.u32 16, %s20
        %p235 = scmp.lt.s32.totalorder %s234, 47
        %s236 = scalar_select %p235, %s234, 47
        %s237 = smul.addr %s236, 4
        %s238 = scalar_lea.vmem %s0, %s237
        %s239 = smul.u32 16, %s20
        %s240 = smul.u32 16, %s20
        %p241 = scmp.lt.s32.totalorder %s240, 47
        %s242 = scalar_select %p241, %s240, 47
        %s243 = smul.addr %s242, 4
        %s244 = scalar_lea.vmem %s3, %s243
        %s245 = smul.u32 16, %s20
        %s246 = smul.u32 16, %s20
        %p247 = scmp.lt.s32.totalorder %s246, 47
        %s248 = scalar_select %p247, %s246, 47
        %s249 = smul.addr %s248, 8
        %s250 = scalar_lea.vmem %s5, %s249
        %s251 = smul.u32 16, %s20
        %v253 = vld [vmem:[%s238] sm:$0xf]
        %v254 = vld [vmem:[%s238 + $0x4] sm:$0xf]
        %v255 = vld [vmem:[%s238 + $0x8] sm:$0xf]
        %v256 = vld [vmem:[%s238 + $0xc] sm:$0xf]
        %v257 = vld [vmem:[%s238 + $0x10] sm:$0xf]
        %v258 = vld [vmem:[%s238 + $0x14] sm:$0xf]
        %v259 = vld [vmem:[%s238 + $0x18] sm:$0xf]
        %v260 = vld [vmem:[%s238 + $0x1c] sm:$0xf]
        %v261 = vld [vmem:[%s238 + $0x20] sm:$0xf]
        %v262 = vld [vmem:[%s238 + $0x24] sm:$0xf]
        %v263 = vld [vmem:[%s238 + $0x28] sm:$0xf]
        %v264 = vld [vmem:[%s238 + $0x2c] sm:$0xf]
        %v265 = vld [vmem:[%s238 + $0x30] sm:$0xf]
        %v266 = vld [vmem:[%s238 + $0x34] sm:$0xf]
        %v267 = vld [vmem:[%s238 + $0x38] sm:$0xf]
        %v268 = vld [vmem:[%s238 + $0x3c] sm:$0xf]
        %v269 = vld [vmem:[%s1] sm:$0xf]
        %v270 = vld [vmem:[%s1 + $0x4] sm:$0xf]
        %v271 = vld [vmem:[%s1 + $0x8] sm:$0xf]
        %v272 = vld [vmem:[%s1 + $0xc] sm:$0xf]
        %v289 = vunpack.c.l.b16 %v253
        %v290 = vunpack.c.l.b16 %v254
        %v291 = vunpack.c.l.b16 %v255
        %v292 = vunpack.c.l.b16 %v256
        %v293 = vunpack.c.l.b16 %v257
        %v294 = vunpack.c.l.b16 %v258
        %v295 = vunpack.c.l.b16 %v259
        %v296 = vunpack.c.l.b16 %v260
        %v297 = vunpack.c.l.b16 %v261
        %v298 = vunpack.c.l.b16 %v262
        %v299 = vunpack.c.l.b16 %v263
        %v300 = vunpack.c.l.b16 %v264
        %v301 = vunpack.c.l.b16 %v265
        %v302 = vunpack.c.l.b16 %v266
        %v303 = vunpack.c.l.b16 %v267
        %v304 = vunpack.c.l.b16 %v268
        %v305 = vpack.c.b16 %v290, %v289
        %v306 = vpack.c.b16 %v292, %v291
        %v307 = vpack.c.b16 %v294, %v293
        %v308 = vpack.c.b16 %v296, %v295
        %v309 = vpack.c.b16 %v298, %v297
        %v310 = vpack.c.b16 %v300, %v299
        %v311 = vpack.c.b16 %v302, %v301
        %v312 = vpack.c.b16 %v304, %v303
        %v317 = vunpack.c.l.b16 %v269
        %v318 = vunpack.c.l.b16 %v270
        %v319 = vunpack.c.l.b16 %v271
        %v320 = vunpack.c.l.b16 %v272
        %v321 = vpack.c.b16 %v318, %v317
        %v322 = vpack.c.b16 %v320, %v319
        %vm325 = vcmask 261120
        %v327 = vsel %vm325, %v305, 0
        %v330 = vsel %vm325, %v306, 0
        %v333 = vsel %vm325, %v307, 0
        %v336 = vsel %vm325, %v308, 0
        %v339 = vsel %vm325, %v309, 0
        %v342 = vsel %vm325, %v310, 0
        %v345 = vsel %vm325, %v311, 0
        %v348 = vsel %vm325, %v312, 0
        %350 = vmatpush.bf16.msra.mxu0 0
        %351 = vmatpush.bf16.msra.mxu0 0
        %352 = vmatpush.bf16.msra.mxu0 0
        %353 = vmatpush.bf16.msra.mxu0 0
        %354 = vmatpush.bf16.msra.mxu0 0
        %355 = vmatpush.bf16.msra.mxu0 0
        %356 = vmatpush.bf16.msra.mxu0 %v322
        %357 = vmatpush.bf16.msra.mxu0 %v321
        %358 = vmatmul.bf16.gmra.mxu0 %v327
        %v359 = vpop.f32.mrf.mxu0
        %v360 = vadd.f32 0.0, %v359
        %v361 = vpop.f32.mrf.mxu0
        %v362 = vadd.f32 0.0, %v361
        %363 = vmatmul.bf16.gmra.mxu0 %v330
        %v364 = vpop.f32.mrf.mxu0
        %v365 = vadd.f32 0.0, %v364
        %v366 = vpop.f32.mrf.mxu0
        %v367 = vadd.f32 0.0, %v366
        %368 = vmatmul.bf16.gmra.mxu0 %v333
        %v369 = vpop.f32.mrf.mxu0
        %v370 = vadd.f32 0.0, %v369
        %v371 = vpop.f32.mrf.mxu0
        %v372 = vadd.f32 0.0, %v371
        %373 = vmatmul.bf16.gmra.mxu0 %v336
        %v374 = vpop.f32.mrf.mxu0
        %v375 = vadd.f32 0.0, %v374
        %v376 = vpop.f32.mrf.mxu0
        %v377 = vadd.f32 0.0, %v376
        %378 = vmatmul.bf16.gmra.mxu0 %v339
        %v379 = vpop.f32.mrf.mxu0
        %v380 = vadd.f32 0.0, %v379
        %v381 = vpop.f32.mrf.mxu0
        %v382 = vadd.f32 0.0, %v381
        %383 = vmatmul.bf16.gmra.mxu0 %v342
        %v384 = vpop.f32.mrf.mxu0
        %v385 = vadd.f32 0.0, %v384
        %v386 = vpop.f32.mrf.mxu0
        %v387 = vadd.f32 0.0, %v386
        %388 = vmatmul.bf16.gmra.mxu0 %v345
        %v389 = vpop.f32.mrf.mxu0
        %v390 = vadd.f32 0.0, %v389
        %v391 = vpop.f32.mrf.mxu0
        %v392 = vadd.f32 0.0, %v391
        %393 = vmatmul.bf16.gmra.mxu0 %v348
        %v394 = vpop.f32.mrf.mxu0
        %v395 = vadd.f32 0.0, %v394
        %v396 = vpop.f32.mrf.mxu0
        %v397 = vadd.f32 0.0, %v396
        %398 = vdwg.mxu0
        %v399 = vpack.c.bf16 %v360, %v360
        %v400 = vpack.c.bf16 %v362, %v362
        %v401 = vpack.c.bf16 %v365, %v365
        %v402 = vpack.c.bf16 %v367, %v367
        %v403 = vpack.c.bf16 %v370, %v370
        %v404 = vpack.c.bf16 %v372, %v372
        %v405 = vpack.c.bf16 %v375, %v375
        %v406 = vpack.c.bf16 %v377, %v377
        %v407 = vpack.c.bf16 %v380, %v380
        %v408 = vpack.c.bf16 %v382, %v382
        %v409 = vpack.c.bf16 %v385, %v385
        %v410 = vpack.c.bf16 %v387, %v387
        %v411 = vpack.c.bf16 %v390, %v390
        %v412 = vpack.c.bf16 %v392, %v392
        %v413 = vpack.c.bf16 %v395, %v395
        %v414 = vpack.c.bf16 %v397, %v397
        %v415 = vld [vmem:[%s2] sm:$0xf]
        %v416 = vld [vmem:[%s2 + $0x4] sm:$0xf]
        %v417 = vld [vmem:[%s2 + $0x8] sm:$0xf]
        %v418 = vld [vmem:[%s2 + $0xc] sm:$0xf]
        %v419 = vld [vmem:[%s2 + $0x10] sm:$0xf]
        %v420 = vld [vmem:[%s2 + $0x14] sm:$0xf]
        %v421 = vld [vmem:[%s2 + $0x18] sm:$0xf]
        %v422 = vld [vmem:[%s2 + $0x1c] sm:$0xf]
        %v439 = vunpack.c.l.b16 %v399
        %v440 = vunpack.c.l.b16 %v400
        %v441 = vunpack.c.l.b16 %v401
        %v442 = vunpack.c.l.b16 %v402
        %v443 = vunpack.c.l.b16 %v403
        %v444 = vunpack.c.l.b16 %v404
        %v445 = vunpack.c.l.b16 %v405
        %v446 = vunpack.c.l.b16 %v406
        %v447 = vunpack.c.l.b16 %v407
        %v448 = vunpack.c.l.b16 %v408
        %v449 = vunpack.c.l.b16 %v409
        %v450 = vunpack.c.l.b16 %v410
        %v451 = vunpack.c.l.b16 %v411
        %v452 = vunpack.c.l.b16 %v412
        %v453 = vunpack.c.l.b16 %v413
        %v454 = vunpack.c.l.b16 %v414
        %v455 = vpack.c.b16 %v440, %v439
        %v456 = vpack.c.b16 %v442, %v441
        %v457 = vpack.c.b16 %v444, %v443
        %v458 = vpack.c.b16 %v446, %v445
        %v459 = vpack.c.b16 %v448, %v447
        %v460 = vpack.c.b16 %v450, %v449
        %v461 = vpack.c.b16 %v452, %v451
        %v462 = vpack.c.b16 %v454, %v453
        %v471 = vunpack.c.l.b16 %v415
        %v472 = vunpack.c.l.b16 %v416
        %v473 = vunpack.c.l.b16 %v417
        %v474 = vunpack.c.l.b16 %v418
        %v475 = vunpack.c.l.b16 %v419
        %v476 = vunpack.c.l.b16 %v420
        %v477 = vunpack.c.l.b16 %v421
        %v478 = vunpack.c.l.b16 %v422
        %v479 = vpack.c.b16 %v472, %v471
        %v480 = vpack.c.b16 %v474, %v473
        %v481 = vpack.c.b16 %v476, %v475
        %v482 = vpack.c.b16 %v478, %v477
        %vm487 = vcmask 523264
        %v489 = vsel %vm487, %v455, 0
        %v492 = vsel %vm487, %v456, 0
        %v495 = vsel %vm487, %v457, 0
        %v498 = vsel %vm487, %v458, 0
        %v501 = vsel %vm487, %v459, 0
        %v504 = vsel %vm487, %v460, 0
        %v507 = vsel %vm487, %v461, 0
        %v510 = vsel %vm487, %v462, 0
        %512 = vmatpush.bf16.msra.mxu0 0
        %513 = vmatpush.bf16.msra.mxu0 0
        %514 = vmatpush.bf16.msra.mxu0 0
        %515 = vmatpush.bf16.msra.mxu0 0
        %516 = vmatpush.bf16.msra.mxu0 %v482
        %517 = vmatpush.bf16.msra.mxu0 %v481
        %518 = vmatpush.bf16.msra.mxu0 %v480
        %519 = vmatpush.bf16.msra.mxu0 %v479
        %520 = vmatmul.bf16.gmra.mxu0 %v489
        %v521 = vpop.f32.mrf.mxu0
        %v522 = vadd.f32 0.0, %v521
        %v523 = vpop.f32.mrf.mxu0
        %v524 = vadd.f32 0.0, %v523
        %525 = vmatmul.bf16.gmra.mxu0 %v492
        %v526 = vpop.f32.mrf.mxu0
        %v527 = vadd.f32 0.0, %v526
        %v528 = vpop.f32.mrf.mxu0
        %v529 = vadd.f32 0.0, %v528
        %530 = vmatmul.bf16.gmra.mxu0 %v495
        %v531 = vpop.f32.mrf.mxu0
        %v532 = vadd.f32 0.0, %v531
        %v533 = vpop.f32.mrf.mxu0
        %v534 = vadd.f32 0.0, %v533
        %535 = vmatmul.bf16.gmra.mxu0 %v498
        %v536 = vpop.f32.mrf.mxu0
        %v537 = vadd.f32 0.0, %v536
        %v538 = vpop.f32.mrf.mxu0
        %v539 = vadd.f32 0.0, %v538
        %540 = vmatmul.bf16.gmra.mxu0 %v501
        %v541 = vpop.f32.mrf.mxu0
        %v542 = vadd.f32 0.0, %v541
        %v543 = vpop.f32.mrf.mxu0
        %v544 = vadd.f32 0.0, %v543
        %545 = vmatmul.bf16.gmra.mxu0 %v504
        %v546 = vpop.f32.mrf.mxu0
        %v547 = vadd.f32 0.0, %v546
        %v548 = vpop.f32.mrf.mxu0
        %v549 = vadd.f32 0.0, %v548
        %550 = vmatmul.bf16.gmra.mxu0 %v507
        %v551 = vpop.f32.mrf.mxu0
        %v552 = vadd.f32 0.0, %v551
        %v553 = vpop.f32.mrf.mxu0
        %v554 = vadd.f32 0.0, %v553
        %555 = vmatmul.bf16.gmra.mxu0 %v510
        %v556 = vpop.f32.mrf.mxu0
        %v557 = vadd.f32 0.0, %v556
        %v558 = vpop.f32.mrf.mxu0
        %v559 = vadd.f32 0.0, %v558
        %560 = vdwg.mxu0
        %561 = vxpose.xlu0.b32.start [1/16] %v522, 128
        %562 = vxpose.xlu0.b32.cont [2/16] %v524, 128
        %563 = vxpose.xlu0.b32.cont [3/16] %v527, 128
        %564 = vxpose.xlu0.b32.cont [4/16] %v529, 128
        %565 = vxpose.xlu0.b32.cont [5/16] %v532, 128
        %566 = vxpose.xlu0.b32.cont [6/16] %v534, 128
        %567 = vxpose.xlu0.b32.cont [7/16] %v537, 128
        %568 = vxpose.xlu0.b32.cont [8/16] %v539, 128
        %569 = vxpose.xlu0.b32.cont [9/16] %v542, 128
        %570 = vxpose.xlu0.b32.cont [10/16] %v544, 128
        %571 = vxpose.xlu0.b32.cont [11/16] %v547, 128
        %572 = vxpose.xlu0.b32.cont [12/16] %v549, 128
        %573 = vxpose.xlu0.b32.cont [13/16] %v552, 128
        %574 = vxpose.xlu0.b32.cont [14/16] %v554, 128
        %575 = vxpose.xlu0.b32.cont [15/16] %v557, 128
        %576 = vxpose.xlu0.b32.end [16/16] %v559, 128
        %v577 = vpop.trf.xlu0
        %v578 = vpop.trf.xlu0
        %v579 = vpop.trf.xlu0
        %v580 = vpop.trf.xlu0
        %v581 = vpop.trf.xlu0
        %v582 = vpop.trf.xlu0
        %v583 = vpop.trf.xlu0
        %v584 = vpop.trf.xlu0
        %v585 = vpop.trf.xlu0
        %v586 = vpop.trf.xlu0
        %v587 = vpop.trf.xlu0
        %v588 = vpop.trf.xlu0
        %v589 = vpop.trf.xlu0
        %v590 = vpop.trf.xlu0
        %v591 = vpop.trf.xlu0
        %v592 = vpop.trf.xlu0
        %593 = vst [vmem:[%s226] sm:$0xf] %v577
        %610 = vrot.lane.b32.xlu0 %v522, 124
        %v611 = vpop.permute.xlu0 %610
        %612 = vrot.lane.b32.xlu0 %v524, 124
        %v613 = vpop.permute.xlu0 %612
        %614 = vrot.lane.b32.xlu0 %v527, 124
        %v615 = vpop.permute.xlu0 %614
        %616 = vrot.lane.b32.xlu0 %v529, 124
        %v617 = vpop.permute.xlu0 %616
        %618 = vrot.lane.b32.xlu0 %v532, 124
        %v619 = vpop.permute.xlu0 %618
        %620 = vrot.lane.b32.xlu0 %v534, 124
        %v621 = vpop.permute.xlu0 %620
        %622 = vrot.lane.b32.xlu0 %v537, 124
        %v623 = vpop.permute.xlu0 %622
        %624 = vrot.lane.b32.xlu0 %v539, 124
        %v625 = vpop.permute.xlu0 %624
        %626 = vrot.lane.b32.xlu0 %v542, 124
        %v627 = vpop.permute.xlu0 %626
        %628 = vrot.lane.b32.xlu0 %v544, 124
        %v629 = vpop.permute.xlu0 %628
        %630 = vrot.lane.b32.xlu0 %v547, 124
        %v631 = vpop.permute.xlu0 %630
        %632 = vrot.lane.b32.xlu0 %v549, 124
        %v633 = vpop.permute.xlu0 %632
        %634 = vrot.lane.b32.xlu0 %v552, 124
        %v635 = vpop.permute.xlu0 %634
        %636 = vrot.lane.b32.xlu0 %v554, 124
        %v637 = vpop.permute.xlu0 %636
        %638 = vrot.lane.b32.xlu0 %v557, 124
        %v639 = vpop.permute.xlu0 %638
        %640 = vrot.lane.b32.xlu0 %v559, 124
        %v641 = vpop.permute.xlu0 %640
        %vm658 = vcmask 31744
        %659 = vst.msk [vmem:[%s250] sm:$0xff] %vm658, %v611
        %660 = vst.msk [vmem:[%s250 + $0x8] sm:$0xff] %vm658, %v613
        %661 = vst.msk [vmem:[%s250 + $0x10] sm:$0xff] %vm658, %v615
        %662 = vst.msk [vmem:[%s250 + $0x18] sm:$0xff] %vm658, %v617
        %663 = vst.msk [vmem:[%s250 + $0x20] sm:$0xff] %vm658, %v619
        %664 = vst.msk [vmem:[%s250 + $0x28] sm:$0xff] %vm658, %v621
        %665 = vst.msk [vmem:[%s250 + $0x30] sm:$0xff] %vm658, %v623
        %666 = vst.msk [vmem:[%s250 + $0x38] sm:$0xff] %vm658, %v625
        %667 = vst.msk [vmem:[%s250 + $0x40] sm:$0xff] %vm658, %v627
        %668 = vst.msk [vmem:[%s250 + $0x48] sm:$0xff] %vm658, %v629
        %669 = vst.msk [vmem:[%s250 + $0x50] sm:$0xff] %vm658, %v631
        %670 = vst.msk [vmem:[%s250 + $0x58] sm:$0xff] %vm658, %v633
        %671 = vst.msk [vmem:[%s250 + $0x60] sm:$0xff] %vm658, %v635
        %672 = vst.msk [vmem:[%s250 + $0x68] sm:$0xff] %vm658, %v637
        %673 = vst.msk [vmem:[%s250 + $0x70] sm:$0xff] %vm658, %v639
        %674 = vst.msk [vmem:[%s250 + $0x78] sm:$0xff] %vm658, %v641
        %vm675 = vcmask 519168
        %676 = vst.msk [vmem:[%s244] sm:$0xf] %vm675, %v399
        %677 = vst.msk [vmem:[%s244 + $0x4] sm:$0xf] %vm675, %v400
        %678 = vst.msk [vmem:[%s244 + $0x8] sm:$0xf] %vm675, %v401
        %679 = vst.msk [vmem:[%s244 + $0xc] sm:$0xf] %vm675, %v402
        %680 = vst.msk [vmem:[%s244 + $0x10] sm:$0xf] %vm675, %v403
        %681 = vst.msk [vmem:[%s244 + $0x14] sm:$0xf] %vm675, %v404
        %682 = vst.msk [vmem:[%s244 + $0x18] sm:$0xf] %vm675, %v405
        %683 = vst.msk [vmem:[%s244 + $0x1c] sm:$0xf] %vm675, %v406
        %684 = vst.msk [vmem:[%s244 + $0x20] sm:$0xf] %vm675, %v407
        %685 = vst.msk [vmem:[%s244 + $0x24] sm:$0xf] %vm675, %v408
        %686 = vst.msk [vmem:[%s244 + $0x28] sm:$0xf] %vm675, %v409
        %687 = vst.msk [vmem:[%s244 + $0x2c] sm:$0xf] %vm675, %v410
        %688 = vst.msk [vmem:[%s244 + $0x30] sm:$0xf] %vm675, %v411
        %689 = vst.msk [vmem:[%s244 + $0x34] sm:$0xf] %vm675, %v412
        %690 = vst.msk [vmem:[%s244 + $0x38] sm:$0xf] %vm675, %v413
        %691 = vst.msk [vmem:[%s244 + $0x3c] sm:$0xf] %vm675, %v414
        %s692 = smul.u32 16, %s20
        %p693 = scmp.lt.s32.totalorder %s692, 47
        %s694 = scalar_select %p693, %s692, 47
        %s695 = smul.addr %s694, 4
        %s696 = scalar_lea.vmem %s3, %s695
        %s697 = sand.u32 %s122, 1
        %s698 = scalar_lea.sflag [#allocation3], %s697
        %s699 = sand.u32 %s122, 1
        %s700 = smul.addr %s699, 4
        %s701 = scalar_lea.vmem [#allocation2], %s700
        %s702 = smul.u32 16, %s20
        %p703 = scmp.lt.s32.totalorder %s702, 47
        %s704 = scalar_select %p703, %s702, 47
        %s705 = smul.addr %s704, 8
        %s706 = scalar_lea.vmem %s5, %s705
        // Predicated region
        $region33: #{tpu_custom_call.1} parent=31 // pred_check
          %p707 = pneg %p106
        $region34: #{tpu_custom_call.1} parent=31 // pred_check_branch
          %709 = sbr.rel (%p707) target = $region36
        $region35: #{tpu_custom_call.1} parent=31 // pred_region
          %s710 = smul.u32 16, %s20
        $region36: #{tpu_custom_call.1} parent=31 // pred_fallthru
          _
        // Predicated region
        $region37: #{tpu_custom_call.1} parent=31 // pred_check
          %p711 = pneg %p132
        $region38: #{tpu_custom_call.1} parent=31 // pred_check_branch
          %713 = sbr.rel (%p711) target = $region40
        $region39: #{tpu_custom_call.1} parent=31 // pred_region
          %715 = vsyncadd %s698, 0
          %s716 = smul.addr %s20, 4
          %s717 = scalar_lea.hbm %s4, %s716
          %s719 = sshll.u32 %s701, 4
          %s720 = int_to_ptr.vmem [resolvable:$true] %s719
          %s721 = sshll.u32 %s717, 4
          %s722 = int_to_ptr.hbm [resolvable:$true] %s721
          %724 = dma.vmem_to_hbm [thread:$0]  %s720, 64, %s722, %s698
        $region40: #{tpu_custom_call.1} parent=31 // pred_fallthru
          _
        // Predicated region
        $region41: #{tpu_custom_call.1} parent=31 // pred_check
          %p725 = pneg %p158
        $region42: #{tpu_custom_call.1} parent=31 // pred_check_branch
          %727 = sbr.rel (%p725) target = $region44
        $region43: #{tpu_custom_call.1} parent=31 // pred_region
          %s728 = smul.u32 16, %s20
        $region44: #{tpu_custom_call.1} parent=31 // pred_fallthru
          _
      $region32: #{tpu_custom_call.1} parent=5 // pred_fallthru
        _
      %p729 = scmp.le.s32.totalorder 2, %s15
      // Predicated region
      $region45: #{tpu_custom_call.1} parent=5 // pred_check
        %p730 = pneg %p729
      $region46: #{tpu_custom_call.1} parent=5 // pred_check_branch
        %732 = sbr.rel (%p730) target = $region48
      $region47: #{tpu_custom_call.1} parent=5 // pred_region
        %s733 = ssub.s32 %s15, 2
        // Predicated region
        $region49: #{tpu_custom_call.1} parent=47 // pred_check
          %p734 = pneg %p112
        $region50: #{tpu_custom_call.1} parent=47 // pred_check_branch
          %736 = sbr.rel (%p734) target = $region52
        $region51: #{tpu_custom_call.1} parent=47 // pred_region
          %s737 = smul.u32 16, %s21
          %p738 = scmp.lt.s32.totalorder %s737, 47
          %s739 = scalar_select %p738, %s737, 47
          %s740 = smul.addr %s739, 4
          %s741 = scalar_lea.vmem %s3, %s740
        $region52: #{tpu_custom_call.1} parent=47 // pred_fallthru
          _
        // Predicated region
        $region53: #{tpu_custom_call.1} parent=47 // pred_check
          %p742 = pneg %p138
        $region54: #{tpu_custom_call.1} parent=47 // pred_check_branch
          %744 = sbr.rel (%p742) target = $region56
        $region55: #{tpu_custom_call.1} parent=47 // pred_region
          %s745 = sand.u32 %s123, 1
          %s746 = scalar_lea.sflag [#allocation3], %s745
          %s747 = sand.u32 %s123, 1
          %s748 = smul.addr %s747, 4
          %s749 = scalar_lea.vmem [#allocation2], %s748
          %751 = dma.done %s746, 64
        $region56: #{tpu_custom_call.1} parent=47 // pred_fallthru
          _
        // Predicated region
        $region57: #{tpu_custom_call.1} parent=47 // pred_check
          %p752 = pneg %p164
        $region58: #{tpu_custom_call.1} parent=47 // pred_check_branch
          %754 = sbr.rel (%p752) target = $region60
        $region59: #{tpu_custom_call.1} parent=47 // pred_region
          %s755 = smul.u32 16, %s21
          %p756 = scmp.lt.s32.totalorder %s755, 47
          %s757 = scalar_select %p756, %s755, 47
          %s758 = smul.addr %s757, 8
          %s759 = scalar_lea.vmem %s5, %s758
        $region60: #{tpu_custom_call.1} parent=47 // pred_fallthru
          _
      $region48: #{tpu_custom_call.1} parent=5 // pred_fallthru
        _
    $region6: #{tpu_custom_call.1} parent=1 // loop_footer
      %s19 = sadd.s32 1, %s15
    $region7: #{tpu_custom_call.1} parent=1 // loop_footer_branch
      %14 = sbr.rel target = $region3
    $region8: #{tpu_custom_call.1} parent=1 // loop_exit
      _
    %760 = vsyncpa [#allocation3], 1
    %s761 = scalar_lea.sflag [#allocation3], 1
    %762 = vsyncpa %s761, 1

</llo_original>
